<compile_context>
chip_gen: v7x
topology: tpu7x:2x2x1
jax: 0.10.0
libtpu: 0.0.40
codegen_flags: <defaults>
</compile_context>

<pallas_src>
import functools

import jax
import jax.numpy as jnp
from jax.experimental import pallas as pl
from jax.experimental.pallas import tpu as pltpu


def _running_max_kernel(x_ref, state_ref, count_ref, new_state_ref, new_count_ref):
    """x_ref: (1, N) f32 values (lane-dense, -inf padded).

    state_ref/count_ref: (1, 1) running max (f32) / new-max event count (i32).
    """
    prev = state_ref[...]                                  # (1, 1) f32
    xv = x_ref[...]                                        # (1, N) f32
    # NaN never beats anything under strict '>' (matches `if val > self._val`);
    # -inf is the identity for max and can never trigger an event.
    xv = jnp.where(xv != xv, -jnp.inf, xv)
    n = xv.shape[1]
    neg_inf = jnp.float32(-jnp.inf)

    if n == 1:
        # Scalar fast path: a single compare, no scan.
        excl_max = prev
    else:
        # Hillis–Steele inclusive prefix max along the lane axis:
        # log2(N) XLU rolls + VPU selects, all on the same (1, N) row.
        lane = jax.lax.broadcasted_iota(jnp.int32, xv.shape, 1)
        pm = xv
        d = 1
        while d < n:
            shifted = jnp.where(lane >= d, pltpu.roll(pm, shift=d, axis=1), neg_inf)
            pm = jnp.maximum(pm, shifted)
            d *= 2
        # Exclusive prefix max = what the running max was just BEFORE element i.
        excl_max = jnp.maximum(
            prev, jnp.where(lane >= 1, pltpu.roll(pm, shift=1, axis=1), neg_inf)
        )

    batch_max = jnp.max(xv, axis=1, keepdims=True)         # (1, 1) XLU reduce
    # Exact number of strict new-max events inside this batch.
    events = jnp.sum((xv > excl_max).astype(jnp.int32), axis=1, keepdims=True)

    new_state_ref[...] = jnp.where(batch_max > prev, batch_max, prev)   # self._val = val
    new_count_ref[...] = count_ref[...] + events                        # deferred hook events


_VMEM = pl.BlockSpec(memory_space=pltpu.MemorySpace.VMEM)


@functools.partial(jax.jit, donate_argnums=(1, 2))
def _running_max_update(x, state, count):
    """Fold x (scalar or (N,) vector) into the running max with ONE pallas_call."""
    x2 = jnp.asarray(x, jnp.float32).reshape(1, -1)
    n = x2.shape[1]
    if n > 1:
        # Pad to a lane-dense multiple of 128 with -inf (identity for running max):
        # full-vreg loads/rolls/reduces, and batch lengths bucket per 128 for jit.
        pad = (-n) % 128
        if pad:
            x2 = jnp.pad(x2, ((0, 0), (0, pad)), constant_values=-jnp.inf)
    return pl.pallas_call(
        _running_max_kernel,
        in_specs=(_VMEM, _VMEM, _VMEM),
        out_specs=(_VMEM, _VMEM),
        out_shape=(
            jax.ShapeDtypeStruct((1, 1), jnp.float32),   # new running max
            jax.ShapeDtypeStruct((1, 1), jnp.int32),     # new-max event count
        ),
        input_output_aliases={1: 0, 2: 1},               # update state/count in place
    )(x2, state, count)


class Maximum:
    """Stateful wrapper mirroring mlogger's Maximum nn.Module (no learnable params)."""

    def __init__(self):
        self.hooks_on_new_max = ()
        self.reset()

    def reset(self):
        self._val = None          # matches `self._val = None`; set to -inf on first update
        self._count = None        # on-device count of new-max events
        self._hooks_fired = 0     # events that have already fired host hooks
        self.hooks_on_new_max = ()
        return self

    def hook_on_new_max(self, hook):
        self.hooks_on_new_max += (hook,)

    def _ensure_state(self):
        if self._val is None:
            self._val = jnp.full((1, 1), -jnp.inf, dtype=jnp.float32)
            self._count = jnp.zeros((1, 1), dtype=jnp.int32)
            self._hooks_fired = 0

    def update(self, val):
        """Fold a scalar or a whole (N,) batch of metric values into the running max.

        Batched calls now count every in-batch new-max event exactly, so one
        batched update is equivalent to N per-scalar forwards (hooks are
        deferred to flush_hooks() in both cases).
        """
        self._ensure_state()
        self._val, self._count = _running_max_update(val, self._val, self._count)
        # TODO(synk): self.channel.update(self.time, self.value) is visdom/plotting
        # I/O with no Pallas equivalent; the running-max compute above is the kernel.

    def flush_hooks(self):
        """Single device->host readback; fires any deferred new-max hooks."""
        if self._count is None:
            return
        pending = int(self._count[0, 0]) - self._hooks_fired
        for _ in range(pending):
            for hook in self.hooks_on_new_max:
                hook()
        self._hooks_fired += pending

    @property
    def value(self):
        if self._val is None:
            return None
        return float(self._val[0, 0])   # one host sync, only when the value is read

    def forward(self, x):
        # Original: self.update(x.item()); return x.  We keep x on device (no
        # .item() sync) and return the ORIGINAL x — identity needs no kernel output.
        self.update(x)
        return x

    __call__ = forward


if __name__ == "__main__":
    key = jax.random.PRNGKey(0)
    # Small stream of scalar "metric" values (the module's forward takes a
    # single-element tensor per step).
    vals = jax.random.normal(key, (8,), dtype=jnp.float32)

    # --- per-step path: 8 scalar forwards, NO per-step host syncs ------------
    m = Maximum()
    fired = []
    m.hook_on_new_max(lambda: fired.append(True))

    outs = [m.forward(vals[i]) for i in range(vals.shape[0])]
    jax.block_until_ready(m._val)
    m.flush_hooks()                      # one readback; fires deferred hooks

    # --- batched path: whole stream folded in ONE pallas_call ----------------
    m_batched = Maximum()
    fired_batched = []
    m_batched.hook_on_new_max(lambda: fired_batched.append(True))
    m_batched.update(vals)
    jax.block_until_ready(m_batched._val)
    m_batched.flush_hooks()

    # ---- reference checks (host side, verification only) --------------------
    host_vals = [float(v) for v in vals]
    expected_max = max(host_vals)
    expected_events = 0
    cur = float("-inf")
    for v in host_vals:
        if v > cur:                      # NaNs never update the max (matches spec)
            cur = v
            expected_events += 1

    ok = True
    for i in range(vals.shape[0]):       # forward() is identity on the original x
        if abs(float(outs[i]) - host_vals[i]) > 1e-6:
            ok = False
    if abs(m.value - expected_max) > 1e-6:
        ok = False
    if len(fired) != expected_events:    # one hook firing per strict new max
        ok = False
    if abs(m_batched.value - expected_max) > 1e-6:
        ok = False
    if len(fired_batched) != expected_events:   # exact in-batch event count
        ok = False

    if ok:
        print("KERNEL_OK")
    else:
        raise SystemExit(
            f"mismatch: value={m.value} batched={m_batched.value} "
            f"expected_max={expected_max} fired={len(fired)} "
            f"fired_batched={len(fired_batched)} expected_events={expected_events}"
        )
</pallas_src>

<mosaic_0001>
module attributes {stable_mosaic.version = 11 : i64} {
  func.func @_running_max_kernel(%arg0: memref<1x1xf32, #tpu.memory_space<vmem>>, %arg1: memref<1x1xf32, #tpu.memory_space<vmem>>, %arg2: memref<1x1xi32, #tpu.memory_space<vmem>>, %arg3: memref<1x1xf32, #tpu.memory_space<vmem>>, %arg4: memref<1x1xi32, #tpu.memory_space<vmem>>) attributes {dimension_semantics = [], scalar_prefetch = 0 : i64, scratch_operands = 0 : i64, tpu.core_type = #tpu.core_type<tc>} {
    %c0 = arith.constant 0 : index
    %c0_0 = arith.constant 0 : index
    %0 = vector.load %arg1[%c0, %c0_0] : memref<1x1xf32, #tpu.memory_space<vmem>>, vector<1x1xf32>
    %c0_1 = arith.constant 0 : index
    %c0_2 = arith.constant 0 : index
    %1 = vector.load %arg0[%c0_1, %c0_2] : memref<1x1xf32, #tpu.memory_space<vmem>>, vector<1x1xf32>
    %2 = arith.cmpf one, %1, %1 : vector<1x1xf32>
    %cst = arith.constant 0xFF800000 : f32
    %3 = vector.broadcast %cst : f32 to vector<1x1xf32>
    %4 = arith.select %2, %3, %1 : vector<1x1xi1>, vector<1x1xf32>
    %cst_3 = arith.constant dense<0xFF800000> : vector<1xf32>
    %5 = vector.multi_reduction <maximumf>, %4, %cst_3 [1] : vector<1x1xf32> to vector<1xf32>
    %6 = vector.shape_cast %5 : vector<1xf32> to vector<1x1xf32>
    %7 = arith.cmpf ogt, %4, %0 : vector<1x1xf32>
    %8 = arith.extui %7 : vector<1x1xi1> to vector<1x1xi32>
    %cst_4 = arith.constant dense<0> : vector<1xi32>
    %9 = vector.multi_reduction <add>, %8, %cst_4 [1] : vector<1x1xi32> to vector<1xi32>
    %10 = vector.shape_cast %9 : vector<1xi32> to vector<1x1xi32>
    %11 = arith.cmpf ogt, %6, %0 : vector<1x1xf32>
    %12 = arith.select %11, %6, %0 : vector<1x1xi1>, vector<1x1xf32>
    %c0_5 = arith.constant 0 : index
    %c0_6 = arith.constant 0 : index
    %13 = vector.load %arg3[%c0_5, %c0_6] : memref<1x1xf32, #tpu.memory_space<vmem>>, vector<1x1xf32>
    tpu.vector_store %arg3[%c0_5, %c0_6], %12 {strides = array<i32>} : memref<1x1xf32, #tpu.memory_space<vmem>>, vector<1x1xf32>,
    %c0_7 = arith.constant 0 : index
    %c0_8 = arith.constant 0 : index
    %14 = vector.load %arg2[%c0_7, %c0_8] : memref<1x1xi32, #tpu.memory_space<vmem>>, vector<1x1xi32>
    %15 = arith.addi %14, %10 : vector<1x1xi32>
    %c0_9 = arith.constant 0 : index
    %c0_10 = arith.constant 0 : index
    %16 = vector.load %arg4[%c0_9, %c0_10] : memref<1x1xi32, #tpu.memory_space<vmem>>, vector<1x1xi32>
    tpu.vector_store %arg4[%c0_9, %c0_10], %15 {strides = array<i32>} : memref<1x1xi32, #tpu.memory_space<vmem>>, vector<1x1xi32>,
    return
  }
}

</mosaic_0001>

<llo_original>
// kernel: _running_max_update.1
$region0: #{_running_max_update.1}
  #allocation0 [shape = 'u32[]', space=smem, size = 0x4, offset = 0x4, fixed_abs, tag = 'smem constant byte address 0x4 - core index']
  #allocation1 [shape = 'u32[144,128]{1,0:T(1,128)}', space=vmem, size = 0x12000, scoped, tag = 'internal scratch']
  #allocation2 [shape = 'f32[1,1]{1,0:T(1,128)S(1)}', space=vmem, size = 0x200, scoped, tag = 'scoped memory for _running_max_update.1']
  #allocation3 [shape = 'f32[1,1]{1,0:T(1,128)S(1)}', space=vmem, size = 0x200, scoped, tag = 'scoped memory for _running_max_update.1']
  #allocation4 [shape = 's32[1,1]{1,0:T(1,128)S(1)}', space=vmem, size = 0x200, scoped, tag = 'scoped memory for _running_max_update.1']
  %s0 = inlined_call_operand.<no memory space> [shape: f32[1,1], index: 0, kind: input, shape index: {}]
  %s1 = inlined_call_operand.<no memory space> [shape: f32[1,1], index: 1, kind: input, shape index: {}, may-alias: {1,3}]
  %s2 = inlined_call_operand.<no memory space> [shape: s32[1,1], index: 2, kind: input, shape index: {}, may-alias: {2,4}]
  %s3 = inlined_call_operand.hbm [shape: f32[1,1], index: 3, kind: output, shape index: {0}, may-alias: {1,3}]
  %s4 = inlined_call_operand.hbm [shape: s32[1,1], index: 4, kind: output, shape index: {1}, may-alias: {2,4}]
  %5 = xla_tuple %s3, %s4
  %s6 = sld [smem:[#allocation0]]
  $region30: #{_running_max_update.1} parent=0
    _
  %s8 = ssub.s32 1, %s6
  %s9 = scalar_select 0, %s8, %s6
  %v10 = vstv %s0
  %11 = vst [vmem:[#allocation2] sm:$0x1] %v10
  %v12 = vstv %s1
  %13 = vst [vmem:[#allocation3] sm:$0x1] %v12
  %v14 = vstv %s2
  %15 = vst [vmem:[#allocation4] sm:$0x1] %v14
  $region1: #{_running_max_update.1} parent=0
    #allocation5 [shape = 'u8[512]{0}', space=vmem, size = 0x400, scoped, tag = 'output window, operand 0, single buffered']
    #allocation6 [shape = 's32[1]{0}', space=sflag, size = 0x4, scoped, tag = 'scoped memory for _running_max_update.1']
    #allocation7 [shape = 'u8[512]{0}', space=vmem, size = 0x400, scoped, tag = 'output window, operand 1, single buffered']
    #allocation8 [shape = 's32[1]{0}', space=sflag, size = 0x4, scoped, tag = 'scoped memory for _running_max_update.1']
    %16 = vsyncpa [#allocation6], 0
    %17 = vsyncpa [#allocation8], 0
    // Predicated region
    $region2: #{_running_max_update.1} parent=1 // pred_check
      _
    $region3: #{_running_max_update.1} parent=1 // pred_check_branch
      %19 = sbr.rel (0) target = $region5
    $region4: #{_running_max_update.1} parent=1 // pred_region
      _
    $region5: #{_running_max_update.1} parent=1 // pred_fallthru
      _
    // Predicated region
    $region6: #{_running_max_update.1} parent=1 // pred_check
      _
    $region7: #{_running_max_update.1} parent=1 // pred_check_branch
      %21 = sbr.rel (0) target = $region9
    $region8: #{_running_max_update.1} parent=1 // pred_region
      _
    $region9: #{_running_max_update.1} parent=1 // pred_fallthru
      _
    // Predicated region
    $region10: #{_running_max_update.1} parent=1 // pred_check
      _
    $region11: #{_running_max_update.1} parent=1 // pred_check_branch
      %23 = sbr.rel (0) target = $region13
    $region12: #{_running_max_update.1} parent=1 // pred_region
      _
    $region13: #{_running_max_update.1} parent=1 // pred_fallthru
      _
    %v24 = vld [vmem:[#allocation3] sm:$0x1]
    %v25 = vld [vmem:[#allocation2] sm:$0x1]
    %vm26 = vcmp.ne.f32.partialorder %v25, %v25
    %v27 = vsel %vm26, -inf, %v25
    %vm28 = vcmp.gt.f32.partialorder %v27, %v24
    %v29 = vsel %vm28, 1, 0
    %v30 = vsel %vm28, %v27, %v24
    %vm31 = vcmask 0
    %32 = vst.msk [vmem:[#allocation5] sm:$0x1] %vm31, %v30
    %v33 = vld [vmem:[#allocation4] sm:$0x1]
    %v34 = vadd.s32 %v33, %v29
    %35 = vst.msk [vmem:[#allocation7] sm:$0x1] %vm31, %v34
    // Predicated region
    $region14: #{_running_max_update.1} parent=1 // pred_check
      _
    $region15: #{_running_max_update.1} parent=1 // pred_check_branch
      %37 = sbr.rel (0) target = $region17
    $region16: #{_running_max_update.1} parent=1 // pred_region
      %s39 = ssub.s32 16, 16
      %40 = vsyncadd [#allocation6], %s39
      %s42 = sshll.u32 [#allocation5], 4
      %s43 = int_to_ptr.vmem [resolvable:$true] %s42
      %45 = dma.vmem_to_hbm [thread:$0]  %s43, 16, %s3, [#allocation6]
    $region17: #{_running_max_update.1} parent=1 // pred_fallthru
      _
    // Predicated region
    $region18: #{_running_max_update.1} parent=1 // pred_check
      _
    $region19: #{_running_max_update.1} parent=1 // pred_check_branch
      %47 = sbr.rel (0) target = $region21
    $region20: #{_running_max_update.1} parent=1 // pred_region
      %s49 = ssub.s32 16, 16
      %50 = vsyncadd [#allocation8], %s49
      %s52 = sshll.u32 [#allocation7], 4
      %s53 = int_to_ptr.vmem [resolvable:$true] %s52
      %55 = dma.vmem_to_hbm [thread:$0]  %s53, 16, %s4, [#allocation8]
    $region21: #{_running_max_update.1} parent=1 // pred_fallthru
      _
    // Predicated region
    $region22: #{_running_max_update.1} parent=1 // pred_check
      _
    $region23: #{_running_max_update.1} parent=1 // pred_check_branch
      %57 = sbr.rel (0) target = $region25
    $region24: #{_running_max_update.1} parent=1 // pred_region
      %58 = dma.done [#allocation6], 16
    $region25: #{_running_max_update.1} parent=1 // pred_fallthru
      _
    // Predicated region
    $region26: #{_running_max_update.1} parent=1 // pred_check
      _
    $region27: #{_running_max_update.1} parent=1 // pred_check_branch
      %60 = sbr.rel (0) target = $region29
    $region28: #{_running_max_update.1} parent=1 // pred_region
      %61 = dma.done [#allocation8], 16
    $region29: #{_running_max_update.1} parent=1 // pred_fallthru
      _
    %62 = vsyncpa [#allocation6], 1
    %63 = vsyncpa [#allocation8], 1

</llo_original>
